<compile_context>
chip_gen: v7x
topology: tpu7x:2x2x1
jax: 0.10.0
libtpu: 0.0.40
codegen_flags: <defaults>
</compile_context>

<pallas_src>
import jax
import jax.numpy as jnp
from jax.experimental import pallas as pl
from jax.experimental.pallas import tpu as pltpu


def _twod_mixer_kernel(x_ref, wcs_ref, a1_ref, b1_ref, a2_ref, b2_ref,
                       adj_ref, wo_ref, rb_ref, out_ref):
    """One batch per grid step; everything lives in the (V*P, F) layout."""
    x = x_ref[0].astype(jnp.float32)                               # (V*P, F)

    # cross_sect: shared Linear(Dh->Dh) over every head, as one matmul with
    # the head-block-diagonal weight. rb_ref[0] = tile(bcs, H).
    cs = jnp.dot(x, wcs_ref[...], preferred_element_type=jnp.float32) + rb_ref[0]

    # cross_time: Linear(P->Dm) -> ReLU -> (dropout=id) -> Linear(Dm->P),
    # acting along the patch axis, expressed as per-variable block-diagonal
    # LEFT matmuls (no transposes), with residual.
    h1 = jnp.maximum(
        jnp.dot(a1_ref[...], cs, preferred_element_type=jnp.float32)
        + b1_ref[...], 0.0)                                        # (V*Dm, F)
    h2 = (jnp.dot(a2_ref[...], h1, preferred_element_type=jnp.float32)
          + b2_ref[...])                                           # (V*P, F)
    ct = h2 + cs

    # adjacency mixing over nvars: single MXU matmul with kron(adj, I_P).
    mixed = jnp.dot(adj_ref[...], ct, preferred_element_type=jnp.float32)

    # output_linear: Linear(F->F). rb_ref[1] = bo.
    out = jnp.dot(mixed, wo_ref[...], preferred_element_type=jnp.float32) + rb_ref[1]
    out_ref[0] = out.astype(out_ref.dtype)


def twod_mixer_forward(z, adjacency, params, n_heads):
    bs, V, P, F = z.shape
    Dh = F // n_heads
    Dm = params["wt1"].shape[1]
    VP, VDm = V * P, V * Dm
    f32 = jnp.float32

    # ---- parameter glue (tiny, one-time XLA ops; no activation traffic) ----
    wcs_bd = jnp.kron(jnp.eye(n_heads, dtype=f32), params["wcs"].astype(f32))   # (F, F)
    a1 = jnp.kron(jnp.eye(V, dtype=f32), params["wt1"].T.astype(f32))           # (V*Dm, V*P)
    a2 = jnp.kron(jnp.eye(V, dtype=f32), params["wt2"].T.astype(f32))           # (V*P, V*Dm)
    adj_big = jnp.kron(adjacency.astype(f32), jnp.eye(P, dtype=f32))            # (V*P, V*P)
    b1col = jnp.tile(params["bt1"].astype(f32), V)[:, None]                     # (V*Dm, 1)
    b2col = jnp.tile(params["bt2"].astype(f32), V)[:, None]                     # (V*P, 1)
    row_bias = jnp.stack([jnp.tile(params["bcs"].astype(f32), n_heads),
                          params["bo"].astype(f32)])                            # (2, F)
    wo = params["wo"].astype(f32)

    z2 = z.reshape(bs, VP, F)     # free reshape; F lanes on load, no head split

    grid_spec = pltpu.PrefetchScalarGridSpec(
        num_scalar_prefetch=0,
        grid=(bs,),
        in_specs=[
            pl.BlockSpec((1, VP, F), lambda b: (b, 0, 0)),   # z slab per batch
            pl.BlockSpec((F, F), lambda b: (0, 0)),          # kron(I_H, Wcs)
            pl.BlockSpec((VDm, VP), lambda b: (0, 0)),       # kron(I_V, Wt1^T)
            pl.BlockSpec((VDm, 1), lambda b: (0, 0)),        # tile(bt1, V) column
            pl.BlockSpec((VP, VDm), lambda b: (0, 0)),       # kron(I_V, Wt2^T)
            pl.BlockSpec((VP, 1), lambda b: (0, 0)),         # tile(bt2, V) column
            pl.BlockSpec((VP, VP), lambda b: (0, 0)),        # kron(adj, I_P)
            pl.BlockSpec((F, F), lambda b: (0, 0)),          # Wo
            pl.BlockSpec((2, F), lambda b: (0, 0)),          # [tile(bcs,H); bo]
        ],
        out_specs=pl.BlockSpec((1, VP, F), lambda b: (b, 0, 0)),
    )
    out = pl.pallas_call(
        _twod_mixer_kernel,
        out_shape=jax.ShapeDtypeStruct((bs, VP, F), z.dtype),
        grid_spec=grid_spec,
        compiler_params=pltpu.CompilerParams(
            dimension_semantics=("parallel",)),
    )(z2, wcs_bd, a1, b1col, a2, b2col, adj_big, wo, row_bias)
    return out.reshape(bs, V, P, F)


def twod_mixer_reference(z, adj, params, n_heads):
    """Pure-JAX transcription of the PyTorch forward (individual=False)."""
    bs, V, P, F = z.shape
    Dh = F // n_heads
    z5 = z.reshape(bs, V, P, n_heads, Dh)
    cs = z5 @ params["wcs"] + params["bcs"]
    out = jnp.transpose(cs, (0, 3, 1, 4, 2))             # (bs,H,V,Dh,P)
    h1 = jax.nn.relu(out @ params["wt1"] + params["bt1"])
    out = (h1 @ params["wt2"] + params["bt2"]) + out
    out = jnp.transpose(out, (0, 1, 2, 4, 3))            # (bs,H,V,P,Dh)
    out = out.reshape(bs, n_heads, V, P * Dh)
    out = jnp.einsum("vw,bhwk->bhvk", adj, out)
    out = out.reshape(bs, n_heads, V, P, Dh)
    out = jnp.transpose(out, (0, 2, 3, 1, 4)).reshape(bs, V, P, F)
    return out @ params["wo"] + params["bo"]


if __name__ == "__main__":
    bs, nvars, patch_num, d_forward = 2, 4, 8, 32
    n_heads, d_mutual = 4, 16
    d_head = d_forward // n_heads

    key = jax.random.PRNGKey(0)
    keys = jax.random.split(key, 10)
    s = 0.1
    params = {
        "wcs": jax.random.normal(keys[0], (d_head, d_head), jnp.float32) * s,
        "bcs": jax.random.normal(keys[1], (d_head,), jnp.float32) * s,
        "wt1": jax.random.normal(keys[2], (patch_num, d_mutual), jnp.float32) * s,
        "bt1": jax.random.normal(keys[3], (d_mutual,), jnp.float32) * s,
        "wt2": jax.random.normal(keys[4], (d_mutual, patch_num), jnp.float32) * s,
        "bt2": jax.random.normal(keys[5], (patch_num,), jnp.float32) * s,
        "wo": jax.random.normal(keys[6], (d_forward, d_forward), jnp.float32) * s,
        "bo": jax.random.normal(keys[7], (d_forward,), jnp.float32) * s,
    }
    z = jax.random.normal(keys[8], (bs, nvars, patch_num, d_forward), jnp.float32)
    adjacency = jax.nn.softmax(
        jax.random.normal(keys[9], (nvars, nvars), jnp.float32), axis=-1)

    out = twod_mixer_forward(z, adjacency, params, n_heads)
    out = jax.block_until_ready(out)

    ref = twod_mixer_reference(z, adjacency, params, n_heads)
    assert out.shape == (bs, nvars, patch_num, d_forward)
    err = float(jnp.max(jnp.abs(out - ref)))
    assert jnp.allclose(out, ref, rtol=1e-4, atol=1e-4), f"max abs err {err}"
    print("KERNEL_OK")
</pallas_src>

<mosaic_0001>
module attributes {stable_mosaic.version = 11 : i64} {
  func.func @_twod_mixer_kernel(%arg0: i32, %arg1: memref<1x32x32xf32, #tpu.memory_space<vmem>>, %arg2: memref<32x32xf32, #tpu.memory_space<vmem>>, %arg3: memref<64x32xf32, #tpu.memory_space<vmem>>, %arg4: memref<64x1xf32, #tpu.memory_space<vmem>>, %arg5: memref<32x64xf32, #tpu.memory_space<vmem>>, %arg6: memref<32x1xf32, #tpu.memory_space<vmem>>, %arg7: memref<32x32xf32, #tpu.memory_space<vmem>>, %arg8: memref<32x32xf32, #tpu.memory_space<vmem>>, %arg9: memref<2x32xf32, #tpu.memory_space<vmem>>, %arg10: memref<1x32x32xf32, #tpu.memory_space<vmem>>) attributes {dimension_semantics = [#tpu.dimension_semantics<parallel>], iteration_bounds = array<i64: 2>, scalar_prefetch = 0 : i64, scratch_operands = 0 : i64, tpu.core_type = #tpu.core_type<tc>, window_params = [{transform_indices = @transform_0, window_bounds = array<i64: 1, 32, 32>}, {pipeline_mode = #tpu.pipeline_mode<synchronous>, transform_indices = @transform_1, window_bounds = array<i64: 32, 32>}, {pipeline_mode = #tpu.pipeline_mode<synchronous>, transform_indices = @transform_2, window_bounds = array<i64: 64, 32>}, {pipeline_mode = #tpu.pipeline_mode<synchronous>, transform_indices = @transform_3, window_bounds = array<i64: 64, 1>}, {pipeline_mode = #tpu.pipeline_mode<synchronous>, transform_indices = @transform_4, window_bounds = array<i64: 32, 64>}, {pipeline_mode = #tpu.pipeline_mode<synchronous>, transform_indices = @transform_5, window_bounds = array<i64: 32, 1>}, {pipeline_mode = #tpu.pipeline_mode<synchronous>, transform_indices = @transform_6, window_bounds = array<i64: 32, 32>}, {pipeline_mode = #tpu.pipeline_mode<synchronous>, transform_indices = @transform_7, window_bounds = array<i64: 32, 32>}, {pipeline_mode = #tpu.pipeline_mode<synchronous>, transform_indices = @transform_8, window_bounds = array<i64: 2, 32>}, {transform_indices = @transform_9, window_bounds = array<i64: 1, 32, 32>}]} {
    %c0 = arith.constant 0 : index
    %c0_0 = arith.constant 0 : index
    %c0_1 = arith.constant 0 : index
    %0 = vector.load %arg1[%c0, %c0_0, %c0_1] : memref<1x32x32xf32, #tpu.memory_space<vmem>>, vector<1x32x32xf32>
    %1 = vector.shape_cast %0 : vector<1x32x32xf32> to vector<32x32xf32>
    %c0_2 = arith.constant 0 : index
    %c0_3 = arith.constant 0 : index
    %2 = vector.load %arg2[%c0_2, %c0_3] : memref<32x32xf32, #tpu.memory_space<vmem>>, vector<32x32xf32>
    %cst = arith.constant dense<0.000000e+00> : vector<32x32xf32>
    %3 = tpu.matmul %1, %2, %cst {dimension_numbers = #tpu.dot_dimension_numbers<[1], [0], [0], [1], [0, 0, 1, 1], [], []>} : vector<32x32xf32>, vector<32x32xf32>, vector<32x32xf32> -> vector<32x32xf32>
    %c0_4 = arith.constant 0 : index
    %c0_5 = arith.constant 0 : index
    %4 = vector.load %arg9[%c0_4, %c0_5] : memref<2x32xf32, #tpu.memory_space<vmem>>, vector<1x32xf32>
    %5 = vector.shape_cast %4 : vector<1x32xf32> to vector<32xf32>
    %6 = vector.shape_cast %5 : vector<32xf32> to vector<1x32xf32>
    %7 = vector.broadcast %6 : vector<1x32xf32> to vector<32x32xf32>
    %8 = arith.addf %3, %7 : vector<32x32xf32>
    %c0_6 = arith.constant 0 : index
    %c0_7 = arith.constant 0 : index
    %9 = vector.load %arg3[%c0_6, %c0_7] : memref<64x32xf32, #tpu.memory_space<vmem>>, vector<64x32xf32>
    %cst_8 = arith.constant dense<0.000000e+00> : vector<64x32xf32>
    %10 = tpu.matmul %9, %8, %cst_8 {dimension_numbers = #tpu.dot_dimension_numbers<[1], [0], [0], [1], [0, 0, 1, 1], [], []>} : vector<64x32xf32>, vector<32x32xf32>, vector<64x32xf32> -> vector<64x32xf32>
    %c0_9 = arith.constant 0 : index
    %c0_10 = arith.constant 0 : index
    %11 = vector.load %arg4[%c0_9, %c0_10] : memref<64x1xf32, #tpu.memory_space<vmem>>, vector<64x1xf32>
    %12 = vector.broadcast %11 : vector<64x1xf32> to vector<64x32xf32>
    %13 = arith.addf %10, %12 : vector<64x32xf32>
    %cst_11 = arith.constant 0.000000e+00 : f32
    %14 = vector.broadcast %cst_11 : f32 to vector<64x32xf32>
    %15 = arith.maximumf %13, %14 : vector<64x32xf32>
    %c0_12 = arith.constant 0 : index
    %c0_13 = arith.constant 0 : index
    %16 = vector.load %arg5[%c0_12, %c0_13] : memref<32x64xf32, #tpu.memory_space<vmem>>, vector<32x64xf32>
    %cst_14 = arith.constant dense<0.000000e+00> : vector<32x32xf32>
    %17 = tpu.matmul %16, %15, %cst_14 {dimension_numbers = #tpu.dot_dimension_numbers<[1], [0], [0], [1], [0, 0, 1, 1], [], []>} : vector<32x64xf32>, vector<64x32xf32>, vector<32x32xf32> -> vector<32x32xf32>
    %c0_15 = arith.constant 0 : index
    %c0_16 = arith.constant 0 : index
    %18 = vector.load %arg6[%c0_15, %c0_16] : memref<32x1xf32, #tpu.memory_space<vmem>>, vector<32x1xf32>
    %19 = vector.broadcast %18 : vector<32x1xf32> to vector<32x32xf32>
    %20 = arith.addf %17, %19 : vector<32x32xf32>
    %21 = arith.addf %20, %8 : vector<32x32xf32>
    %c0_17 = arith.constant 0 : index
    %c0_18 = arith.constant 0 : index
    %22 = vector.load %arg7[%c0_17, %c0_18] : memref<32x32xf32, #tpu.memory_space<vmem>>, vector<32x32xf32>
    %cst_19 = arith.constant dense<0.000000e+00> : vector<32x32xf32>
    %23 = tpu.matmul %22, %21, %cst_19 {dimension_numbers = #tpu.dot_dimension_numbers<[1], [0], [0], [1], [0, 0, 1, 1], [], []>} : vector<32x32xf32>, vector<32x32xf32>, vector<32x32xf32> -> vector<32x32xf32>
    %c0_20 = arith.constant 0 : index
    %c0_21 = arith.constant 0 : index
    %24 = vector.load %arg8[%c0_20, %c0_21] : memref<32x32xf32, #tpu.memory_space<vmem>>, vector<32x32xf32>
    %cst_22 = arith.constant dense<0.000000e+00> : vector<32x32xf32>
    %25 = tpu.matmul %23, %24, %cst_22 {dimension_numbers = #tpu.dot_dimension_numbers<[1], [0], [0], [1], [0, 0, 1, 1], [], []>} : vector<32x32xf32>, vector<32x32xf32>, vector<32x32xf32> -> vector<32x32xf32>
    %c1 = arith.constant 1 : index
    %c0_23 = arith.constant 0 : index
    %26 = vector.load %arg9[%c1, %c0_23] : memref<2x32xf32, #tpu.memory_space<vmem>>, vector<1x32xf32>
    %27 = vector.shape_cast %26 : vector<1x32xf32> to vector<32xf32>
    %28 = vector.shape_cast %27 : vector<32xf32> to vector<1x32xf32>
    %29 = vector.broadcast %28 : vector<1x32xf32> to vector<32x32xf32>
    %30 = arith.addf %25, %29 : vector<32x32xf32>
    %c0_24 = arith.constant 0 : index
    %c0_25 = arith.constant 0 : index
    %c0_26 = arith.constant 0 : index
    %31 = vector.load %arg10[%c0_24, %c0_25, %c0_26] : memref<1x32x32xf32, #tpu.memory_space<vmem>>, vector<1x32x32xf32>
    %32 = vector.shape_cast %31 : vector<1x32x32xf32> to vector<32x32xf32>
    %33 = vector.shape_cast %30 : vector<32x32xf32> to vector<1x32x32xf32>
    tpu.vector_store %arg10[%c0_24, %c0_25, %c0_26], %33 {strides = array<i32>} : memref<1x32x32xf32, #tpu.memory_space<vmem>>, vector<1x32x32xf32>,
    return
  }
  func.func @transform_0(%arg0: i32) -> (i32, i32, i32) {
    %c0_i32 = arith.constant 0 : i32
    %c0_i32_0 = arith.constant 0 : i32
    %c0_i32_1 = arith.constant 0 : i32
    return %arg0, %c0_i32, %c0_i32_0 : i32, i32, i32
  }
  func.func @transform_1(%arg0: i32) -> (i32, i32) {
    %c0_i32 = arith.constant 0 : i32
    %c0_i32_0 = arith.constant 0 : i32
    %c0_i32_1 = arith.constant 0 : i32
    return %c0_i32, %c0_i32_0 : i32, i32
  }
  func.func @transform_2(%arg0: i32) -> (i32, i32) {
    %c0_i32 = arith.constant 0 : i32
    %c0_i32_0 = arith.constant 0 : i32
    %c0_i32_1 = arith.constant 0 : i32
    return %c0_i32, %c0_i32_0 : i32, i32
  }
  func.func @transform_3(%arg0: i32) -> (i32, i32) {
    %c0_i32 = arith.constant 0 : i32
    %c0_i32_0 = arith.constant 0 : i32
    %c0_i32_1 = arith.constant 0 : i32
    return %c0_i32, %c0_i32_0 : i32, i32
  }
  func.func @transform_4(%arg0: i32) -> (i32, i32) {
    %c0_i32 = arith.constant 0 : i32
    %c0_i32_0 = arith.constant 0 : i32
    %c0_i32_1 = arith.constant 0 : i32
    return %c0_i32, %c0_i32_0 : i32, i32
  }
  func.func @transform_5(%arg0: i32) -> (i32, i32) {
    %c0_i32 = arith.constant 0 : i32
    %c0_i32_0 = arith.constant 0 : i32
    %c0_i32_1 = arith.constant 0 : i32
    return %c0_i32, %c0_i32_0 : i32, i32
  }
  func.func @transform_6(%arg0: i32) -> (i32, i32) {
    %c0_i32 = arith.constant 0 : i32
    %c0_i32_0 = arith.constant 0 : i32
    %c0_i32_1 = arith.constant 0 : i32
    return %c0_i32, %c0_i32_0 : i32, i32
  }
  func.func @transform_7(%arg0: i32) -> (i32, i32) {
    %c0_i32 = arith.constant 0 : i32
    %c0_i32_0 = arith.constant 0 : i32
    %c0_i32_1 = arith.constant 0 : i32
    return %c0_i32, %c0_i32_0 : i32, i32
  }
  func.func @transform_8(%arg0: i32) -> (i32, i32) {
    %c0_i32 = arith.constant 0 : i32
    %c0_i32_0 = arith.constant 0 : i32
    %c0_i32_1 = arith.constant 0 : i32
    return %c0_i32, %c0_i32_0 : i32, i32
  }
  func.func @transform_9(%arg0: i32) -> (i32, i32, i32) {
    %c0_i32 = arith.constant 0 : i32
    %c0_i32_0 = arith.constant 0 : i32
    %c0_i32_1 = arith.constant 0 : i32
    return %arg0, %c0_i32, %c0_i32_0 : i32, i32, i32
  }
}

</mosaic_0001>

<llo_original>
// kernel: tpu_custom_call.1
$region0: #{tpu_custom_call.1}
  #allocation0 [shape = 'u32[]', space=smem, size = 0x4, offset = 0x4, fixed_abs, tag = 'smem constant byte address 0x4 - core index']
  #allocation1 [shape = 'u32[144,128]{1,0:T(1,128)}', space=vmem, size = 0x12000, scoped, tag = 'internal scratch']
  %s0 = inlined_call_operand.vmem [shape: f32[2,32,32], index: 0, kind: input, shape index: {}]
  %s1 = inlined_call_operand.vmem [shape: f32[32,32], index: 1, kind: input, shape index: {}]
  %s2 = inlined_call_operand.vmem [shape: f32[64,32], index: 2, kind: input, shape index: {}]
  %s3 = inlined_call_operand.vmem [shape: f32[64,1], index: 3, kind: input, shape index: {}]
  %s4 = inlined_call_operand.vmem [shape: f32[32,64], index: 4, kind: input, shape index: {}]
  %s5 = inlined_call_operand.vmem [shape: f32[32,1], index: 5, kind: input, shape index: {}]
  %s6 = inlined_call_operand.vmem [shape: f32[32,32], index: 6, kind: input, shape index: {}]
  %s7 = inlined_call_operand.hbm [shape: f32[32,32], index: 7, kind: input, shape index: {}]
  %s8 = inlined_call_operand.vmem [shape: f32[2,32], index: 8, kind: input, shape index: {}]
  %s9 = inlined_call_operand.hbm [shape: f32[2,32,32], index: 9, kind: output, shape index: {}]
  %s10 = sld [smem:[#allocation0]]
  $region73: #{tpu_custom_call.1} parent=0
    _
  %s12 = ssub.s32 1, %s10
  %s13 = scalar_select 0, %s12, %s10
  $region1: #{tpu_custom_call.1} parent=0
    #allocation2 [shape = 'u8[16384]{0}', space=vmem, size = 0x4000, scoped, tag = 'input window, operand 7, single buffered']
    #allocation3 [shape = 's32[2]{0}', space=sflag, size = 0x8, scoped, tag = 'scoped memory for tpu_custom_call.1']
    #allocation4 [shape = 's32[2]{0}', space=sflag, size = 0x8, scoped, tag = 'scoped memory for tpu_custom_call.1']
    #allocation5 [shape = 'u8[32768]{0}', space=vmem, size = 0x8000, scoped, tag = 'output window, operand 0']
    %14 = vsyncpa [#allocation3], 0
    %15 = vsyncpa [#allocation4], 0
    %s16 = scalar_lea.sflag [#allocation4], 1
    %17 = vsyncpa %s16, 0
    loop: start=0, step=1, limit=4
    $region2: #{tpu_custom_call.1} parent=1 // loop_pre_header
      _
    $region3: #{tpu_custom_call.1} parent=1 // loop_header
      %s19 = sphi 0, %s23
      %p20 = scmp.ge.s32.totalorder %s19, 4
      %s29 = sphi 0, %s31
      %s32 = sphi 0, %s29
      %s33 = sphi 0, %s32
      %s49 = sphi 0, %s33
      %s53 = sphi 0, %s53
      %s55 = sphi 0, %s53
      %s56 = sphi 0, %s55
      %s70 = sphi 0, %s56
      %s74 = sphi 0, %s74
      %s76 = sphi 0, %s74
      %s77 = sphi 0, %s76
      %s91 = sphi 0, %s77
      %s95 = sphi 0, %s95
      %s97 = sphi 0, %s95
      %s98 = sphi 0, %s97
      %s112 = sphi 0, %s98
      %s116 = sphi 0, %s116
      %s118 = sphi 0, %s116
      %s119 = sphi 0, %s118
      %s133 = sphi 0, %s119
      %s137 = sphi 0, %s137
      %s139 = sphi 0, %s137
      %s140 = sphi 0, %s139
      %s154 = sphi 0, %s140
      %s158 = sphi 0, %s158
      %s160 = sphi 0, %s158
      %s161 = sphi 0, %s160
      %s175 = sphi 0, %s161
      %s179 = sphi 0, %s179
      %s181 = sphi 0, %s179
      %s182 = sphi 0, %s181
      %s196 = sphi 0, %s182
      %s200 = sphi 0, %s200
      %s202 = sphi 0, %s200
      %s203 = sphi 0, %s202
      %s217 = sphi 0, %s203
      %s223 = sphi 0, %s225
      %s226 = sphi 0, %s223
      %s227 = sphi 0, %s226
      %s243 = sphi 0, %s227
    $region4: #{tpu_custom_call.1} parent=1 // loop_header_branch
      %22 = sbr.rel (%p20) target = $region8
    $region5: #{tpu_custom_call.1} parent=1 // loop_body
      %s24 = ssub.s32 %s19, 1
      %s25 = ssub.s32 %s19, 2
      %s26 = sadd.s32 %s19, 1
      %s27 = ssub.s32 %s19, %s26
      %p28 = scmp.eq.s32.totalorder %s27, 0
      %s30 = sadd.s32 %s29, 1
      %s31 = scalar_select %p28, %s29, %s30
      %p34 = pneg %p28
      %p35 = scmp.eq.s32.totalorder %s19, 1
      %p36 = por %p34, %p35
      %p37 = scmp.ne.s32.totalorder %s29, %s32
      %p38 = scmp.eq.s32.totalorder %s19, 0
      %p39 = por %p37, %p38
      %p40 = scmp.ne.s32.totalorder %s29, %s32
      %p41 = scmp.eq.s32.totalorder %s24, 1
      %p42 = por %p40, %p41
      %p43 = scmp.ne.s32.totalorder %s32, %s33
      %p44 = scmp.eq.s32.totalorder %s24, 0
      %p45 = por %p43, %p44
      %p46 = scmp.ne.s32.totalorder %s32, %s33
      %p47 = scmp.eq.s32.totalorder %s25, 1
      %p48 = por %p46, %p47
      %p50 = scmp.ne.s32.totalorder %s33, %s49
      %p51 = scmp.eq.s32.totalorder %s25, 0
      %p52 = por %p50, %p51
      %s54 = sadd.s32 %s53, 1
      %p57 = scmp.eq.s32.totalorder %s19, 1
      %p58 = scmp.ne.s32.totalorder %s53, %s55
      %p59 = scmp.eq.s32.totalorder %s19, 0
      %p60 = por %p58, %p59
      %p61 = scmp.ne.s32.totalorder %s53, %s55
      %p62 = scmp.eq.s32.totalorder %s24, 1
      %p63 = por %p61, %p62
      %p64 = scmp.ne.s32.totalorder %s55, %s56
      %p65 = scmp.eq.s32.totalorder %s24, 0
      %p66 = por %p64, %p65
      %p67 = scmp.ne.s32.totalorder %s55, %s56
      %p68 = scmp.eq.s32.totalorder %s25, 1
      %p69 = por %p67, %p68
      %p71 = scmp.ne.s32.totalorder %s56, %s70
      %p72 = scmp.eq.s32.totalorder %s25, 0
      %p73 = por %p71, %p72
      %s75 = sadd.s32 %s74, 1
      %p78 = scmp.eq.s32.totalorder %s19, 1
      %p79 = scmp.ne.s32.totalorder %s74, %s76
      %p80 = scmp.eq.s32.totalorder %s19, 0
      %p81 = por %p79, %p80
      %p82 = scmp.ne.s32.totalorder %s74, %s76
      %p83 = scmp.eq.s32.totalorder %s24, 1
      %p84 = por %p82, %p83
      %p85 = scmp.ne.s32.totalorder %s76, %s77
      %p86 = scmp.eq.s32.totalorder %s24, 0
      %p87 = por %p85, %p86
      %p88 = scmp.ne.s32.totalorder %s76, %s77
      %p89 = scmp.eq.s32.totalorder %s25, 1
      %p90 = por %p88, %p89
      %p92 = scmp.ne.s32.totalorder %s77, %s91
      %p93 = scmp.eq.s32.totalorder %s25, 0
      %p94 = por %p92, %p93
      %s96 = sadd.s32 %s95, 1
      %p99 = scmp.eq.s32.totalorder %s19, 1
      %p100 = scmp.ne.s32.totalorder %s95, %s97
      %p101 = scmp.eq.s32.totalorder %s19, 0
      %p102 = por %p100, %p101
      %p103 = scmp.ne.s32.totalorder %s95, %s97
      %p104 = scmp.eq.s32.totalorder %s24, 1
      %p105 = por %p103, %p104
      %p106 = scmp.ne.s32.totalorder %s97, %s98
      %p107 = scmp.eq.s32.totalorder %s24, 0
      %p108 = por %p106, %p107
      %p109 = scmp.ne.s32.totalorder %s97, %s98
      %p110 = scmp.eq.s32.totalorder %s25, 1
      %p111 = por %p109, %p110
      %p113 = scmp.ne.s32.totalorder %s98, %s112
      %p114 = scmp.eq.s32.totalorder %s25, 0
      %p115 = por %p113, %p114
      %s117 = sadd.s32 %s116, 1
      %p120 = scmp.eq.s32.totalorder %s19, 1
      %p121 = scmp.ne.s32.totalorder %s116, %s118
      %p122 = scmp.eq.s32.totalorder %s19, 0
      %p123 = por %p121, %p122
      %p124 = scmp.ne.s32.totalorder %s116, %s118
      %p125 = scmp.eq.s32.totalorder %s24, 1
      %p126 = por %p124, %p125
      %p127 = scmp.ne.s32.totalorder %s118, %s119
      %p128 = scmp.eq.s32.totalorder %s24, 0
      %p129 = por %p127, %p128
      %p130 = scmp.ne.s32.totalorder %s118, %s119
      %p131 = scmp.eq.s32.totalorder %s25, 1
      %p132 = por %p130, %p131
      %p134 = scmp.ne.s32.totalorder %s119, %s133
      %p135 = scmp.eq.s32.totalorder %s25, 0
      %p136 = por %p134, %p135
      %s138 = sadd.s32 %s137, 1
      %p141 = scmp.eq.s32.totalorder %s19, 1
      %p142 = scmp.ne.s32.totalorder %s137, %s139
      %p143 = scmp.eq.s32.totalorder %s19, 0
      %p144 = por %p142, %p143
      %p145 = scmp.ne.s32.totalorder %s137, %s139
      %p146 = scmp.eq.s32.totalorder %s24, 1
      %p147 = por %p145, %p146
      %p148 = scmp.ne.s32.totalorder %s139, %s140
      %p149 = scmp.eq.s32.totalorder %s24, 0
      %p150 = por %p148, %p149
      %p151 = scmp.ne.s32.totalorder %s139, %s140
      %p152 = scmp.eq.s32.totalorder %s25, 1
      %p153 = por %p151, %p152
      %p155 = scmp.ne.s32.totalorder %s140, %s154
      %p156 = scmp.eq.s32.totalorder %s25, 0
      %p157 = por %p155, %p156
      %s159 = sadd.s32 %s158, 1
      %p162 = scmp.eq.s32.totalorder %s19, 1
      %p163 = scmp.ne.s32.totalorder %s158, %s160
      %p164 = scmp.eq.s32.totalorder %s19, 0
      %p165 = por %p163, %p164
      %p166 = scmp.ne.s32.totalorder %s158, %s160
      %p167 = scmp.eq.s32.totalorder %s24, 1
      %p168 = por %p166, %p167
      %p169 = scmp.ne.s32.totalorder %s160, %s161
      %p170 = scmp.eq.s32.totalorder %s24, 0
      %p171 = por %p169, %p170
      %p172 = scmp.ne.s32.totalorder %s160, %s161
      %p173 = scmp.eq.s32.totalorder %s25, 1
      %p174 = por %p172, %p173
      %p176 = scmp.ne.s32.totalorder %s161, %s175
      %p177 = scmp.eq.s32.totalorder %s25, 0
      %p178 = por %p176, %p177
      %s180 = sadd.s32 %s179, 1
      %p183 = scmp.eq.s32.totalorder %s19, 1
      %p184 = scmp.ne.s32.totalorder %s179, %s181
      %p185 = scmp.eq.s32.totalorder %s19, 0
      %p186 = por %p184, %p185
      %p187 = scmp.ne.s32.totalorder %s179, %s181
      %p188 = scmp.eq.s32.totalorder %s24, 1
      %p189 = por %p187, %p188
      %p190 = scmp.ne.s32.totalorder %s181, %s182
      %p191 = scmp.eq.s32.totalorder %s24, 0
      %p192 = por %p190, %p191
      %p193 = scmp.ne.s32.totalorder %s181, %s182
      %p194 = scmp.eq.s32.totalorder %s25, 1
      %p195 = por %p193, %p194
      %p197 = scmp.ne.s32.totalorder %s182, %s196
      %p198 = scmp.eq.s32.totalorder %s25, 0
      %p199 = por %p197, %p198
      %s201 = sadd.s32 %s200, 1
      %p204 = scmp.eq.s32.totalorder %s19, 1
      %p205 = scmp.ne.s32.totalorder %s200, %s202
      %p206 = scmp.eq.s32.totalorder %s19, 0
      %p207 = por %p205, %p206
      %p208 = scmp.ne.s32.totalorder %s200, %s202
      %p209 = scmp.eq.s32.totalorder %s24, 1
      %p210 = por %p208, %p209
      %p211 = scmp.ne.s32.totalorder %s202, %s203
      %p212 = scmp.eq.s32.totalorder %s24, 0
      %p213 = por %p211, %p212
      %p214 = scmp.ne.s32.totalorder %s202, %s203
      %p215 = scmp.eq.s32.totalorder %s25, 1
      %p216 = por %p214, %p215
      %p218 = scmp.ne.s32.totalorder %s203, %s217
      %p219 = scmp.eq.s32.totalorder %s25, 0
      %p220 = por %p218, %p219
      %s221 = ssub.s32 %s19, %s26
      %p222 = scmp.eq.s32.totalorder %s221, 0
      %s224 = sadd.s32 %s223, 1
      %s225 = scalar_select %p222, %s223, %s224
      %p228 = pneg %p222
      %p229 = scmp.eq.s32.totalorder %s19, 1
      %p230 = por %p228, %p229
      %p231 = scmp.ne.s32.totalorder %s223, %s226
      %p232 = scmp.eq.s32.totalorder %s19, 0
      %p233 = por %p231, %p232
      %p234 = scmp.ne.s32.totalorder %s223, %s226
      %p235 = scmp.eq.s32.totalorder %s24, 1
      %p236 = por %p234, %p235
      %p237 = scmp.ne.s32.totalorder %s226, %s227
      %p238 = scmp.eq.s32.totalorder %s24, 0
      %p239 = por %p237, %p238
      %p240 = scmp.ne.s32.totalorder %s226, %s227
      %p241 = scmp.eq.s32.totalorder %s25, 1
      %p242 = por %p240, %p241
      %p244 = scmp.ne.s32.totalorder %s227, %s243
      %p245 = scmp.eq.s32.totalorder %s25, 0
      %p246 = por %p244, %p245
      %p247 = scmp.le.s32.totalorder 1, %s19
      %p248 = scmp.lt.s32.totalorder %s19, 3
      %p249 = pnand %p247, %p248
      %p250 = pneg %p249
      // Predicated region
      $region9: #{tpu_custom_call.1} parent=5 // pred_check
        _
      $region10: #{tpu_custom_call.1} parent=5 // pred_check_branch
        %252 = sbr.rel (%p249) target = $region12
      $region11: #{tpu_custom_call.1} parent=5 // pred_region
        %s253 = ssub.s32 %s19, 1
        // Predicated region
        $region13: #{tpu_custom_call.1} parent=11 // pred_check
          %p254 = pneg %p66
        $region14: #{tpu_custom_call.1} parent=11 // pred_check_branch
          %256 = sbr.rel (%p254) target = $region16
        $region15: #{tpu_custom_call.1} parent=11 // pred_region
          _
        $region16: #{tpu_custom_call.1} parent=11 // pred_fallthru
          _
        // Predicated region
        $region17: #{tpu_custom_call.1} parent=11 // pred_check
          %p257 = pneg %p87
        $region18: #{tpu_custom_call.1} parent=11 // pred_check_branch
          %259 = sbr.rel (%p257) target = $region20
        $region19: #{tpu_custom_call.1} parent=11 // pred_region
          _
        $region20: #{tpu_custom_call.1} parent=11 // pred_fallthru
          _
        // Predicated region
        $region21: #{tpu_custom_call.1} parent=11 // pred_check
          %p260 = pneg %p108
        $region22: #{tpu_custom_call.1} parent=11 // pred_check_branch
          %262 = sbr.rel (%p260) target = $region24
        $region23: #{tpu_custom_call.1} parent=11 // pred_region
          _
        $region24: #{tpu_custom_call.1} parent=11 // pred_fallthru
          _
        // Predicated region
        $region25: #{tpu_custom_call.1} parent=11 // pred_check
          %p263 = pneg %p129
        $region26: #{tpu_custom_call.1} parent=11 // pred_check_branch
          %265 = sbr.rel (%p263) target = $region28
        $region27: #{tpu_custom_call.1} parent=11 // pred_region
          _
        $region28: #{tpu_custom_call.1} parent=11 // pred_fallthru
          _
        // Predicated region
        $region29: #{tpu_custom_call.1} parent=11 // pred_check
          %p266 = pneg %p150
        $region30: #{tpu_custom_call.1} parent=11 // pred_check_branch
          %268 = sbr.rel (%p266) target = $region32
        $region31: #{tpu_custom_call.1} parent=11 // pred_region
          _
        $region32: #{tpu_custom_call.1} parent=11 // pred_fallthru
          _
        // Predicated region
        $region33: #{tpu_custom_call.1} parent=11 // pred_check
          %p269 = pneg %p171
        $region34: #{tpu_custom_call.1} parent=11 // pred_check_branch
          %271 = sbr.rel (%p269) target = $region36
        $region35: #{tpu_custom_call.1} parent=11 // pred_region
          _
        $region36: #{tpu_custom_call.1} parent=11 // pred_fallthru
          _
        // Predicated region
        $region37: #{tpu_custom_call.1} parent=11 // pred_check
          %p272 = pneg %p192
        $region38: #{tpu_custom_call.1} parent=11 // pred_check_branch
          %274 = sbr.rel (%p272) target = $region40
        $region39: #{tpu_custom_call.1} parent=11 // pred_region
          %s276 = ssub.s32 512, 512
          %277 = vsyncadd [#allocation3], %s276
          %s278 = sshll.u32 [#allocation2], 4
          %s279 = int_to_ptr.vmem [resolvable:$true] %s278
          %284 = dma.hbm_to_vmem [thread:$0]  %s7, 512, %s279, [#allocation3], 128, 128, 8
        $region40: #{tpu_custom_call.1} parent=11 // pred_fallthru
          _
        // Predicated region
        $region41: #{tpu_custom_call.1} parent=11 // pred_check
          %p285 = pneg %p213
        $region42: #{tpu_custom_call.1} parent=11 // pred_check_branch
          %287 = sbr.rel (%p285) target = $region44
        $region43: #{tpu_custom_call.1} parent=11 // pred_region
          _
        $region44: #{tpu_custom_call.1} parent=11 // pred_fallthru
          _
      $region12: #{tpu_custom_call.1} parent=5 // pred_fallthru
        _
      %p288 = scmp.lt.s32.totalorder %s19, 2
      // Predicated region
      $region45: #{tpu_custom_call.1} parent=5 // pred_check
        %p289 = pneg %p288
      $region46: #{tpu_custom_call.1} parent=5 // pred_check_branch
        %291 = sbr.rel (%p289) target = $region48
      $region47: #{tpu_custom_call.1} parent=5 // pred_region
        // Predicated region
        $region49: #{tpu_custom_call.1} parent=47 // pred_check
          %p292 = pneg %p39
        $region50: #{tpu_custom_call.1} parent=47 // pred_check_branch
          %294 = sbr.rel (%p292) target = $region52
        $region51: #{tpu_custom_call.1} parent=47 // pred_region
          %p295 = scmp.lt.s32.totalorder %s19, 1
          %s296 = scalar_select %p295, %s19, 1
          %s297 = smul.addr %s296, 4
          %s298 = smul.addr %s297, 8
          %s299 = scalar_lea.vmem %s0, %s298
        $region52: #{tpu_custom_call.1} parent=47 // pred_fallthru
          _
      $region48: #{tpu_custom_call.1} parent=5 // pred_fallthru
        _
      %p300 = scmp.le.s32.totalorder 1, %s19
      %p301 = scmp.lt.s32.totalorder %s19, 3
      %p302 = pnand %p300, %p301
      %p303 = pneg %p302
      // Predicated region
      $region53: #{tpu_custom_call.1} parent=5 // pred_check
        _
      $region54: #{tpu_custom_call.1} parent=5 // pred_check_branch
        %305 = sbr.rel (%p302) target = $region56
      $region55: #{tpu_custom_call.1} parent=5 // pred_region
        %s306 = ssub.s32 %s19, 1
        // Predicated region
        $region57: #{tpu_custom_call.1} parent=55 // pred_check
          %p307 = pneg %p192
        $region58: #{tpu_custom_call.1} parent=55 // pred_check_branch
          %309 = sbr.rel (%p307) target = $region60
        $region59: #{tpu_custom_call.1} parent=55 // pred_region
          %310 = dma.done [#allocation3], 512
        $region60: #{tpu_custom_call.1} parent=55 // pred_fallthru
          _
        %p311 = scmp.lt.s32.totalorder %s24, 1
        %s312 = scalar_select %p311, %s24, 1
        %s313 = smul.addr %s312, 4
        %s314 = smul.addr %s313, 8
        %s315 = scalar_lea.vmem %s0, %s314
        %p316 = pneg %p45
        %p317 = pneg %p42
        %p318 = pneg %p66
        %p319 = pneg %p63
        %p320 = pneg %p87
        %p321 = pneg %p84
        %p322 = pneg %p108
        %p323 = pneg %p105
        %p324 = pneg %p129
        %p325 = pneg %p126
        %p326 = pneg %p150
        %p327 = pneg %p147
        %p328 = pneg %p171
        %p329 = pneg %p168
        %p330 = pneg %p192
        %p331 = pneg %p189
        %p332 = pneg %p213
        %p333 = pneg %p210
        %p334 = pneg %p239
        %p335 = pneg %p236
        %s336 = sand.u32 %s226, 1
        %s337 = scalar_lea.sflag [#allocation4], %s336
        %s338 = sand.u32 %s226, 1
        %s339 = smul.addr %s338, 32
        %s340 = scalar_lea.vmem [#allocation5], %s339
        %p341 = scmp.lt.s32.totalorder %s24, 1
        %s342 = scalar_select %p341, %s24, 1
        %s343 = smul.addr %s342, 4
        %s344 = smul.addr %s343, 8
        %s345 = scalar_lea.vmem %s0, %s344
        %v346 = vld [vmem:[%s345] sm:$0xff]
        %v347 = vld [vmem:[%s345 + $0x8] sm:$0xff]
        %v348 = vld [vmem:[%s345 + $0x10] sm:$0xff]
        %v349 = vld [vmem:[%s345 + $0x18] sm:$0xff]
        %v350 = vld [vmem:[%s1] sm:$0xff]
        %v351 = vld [vmem:[%s1 + $0x8] sm:$0xff]
        %v352 = vld [vmem:[%s1 + $0x10] sm:$0xff]
        %v353 = vld [vmem:[%s1 + $0x18] sm:$0xff]
        %v354 = vld [vmem:[%s8] sm:$0x1]
        %v355 = vlaneseq
        %v356 = vshrl.u32 %v355, 7
        %v357 = vsub.s32 0, %v356
        %v358 = vrot.slane %v354, %v357
        %vm359 = vcmask 261120
        %v361 = vsel %vm359, %v346, 0
        %v364 = vsel %vm359, %v347, 0
        %v367 = vsel %vm359, %v348, 0
        %v370 = vsel %vm359, %v349, 0
        %372 = vmatprep.subr.mxu0 0.0
        %373 = vmatpush1.msra.mxu0 %v350
        %374 = vmatprep.subr.mxu0 0.0
        %375 = vmatpush1.msra.mxu0 %v351
        %376 = vmatprep.subr.mxu0 0.0
        %377 = vmatpush1.msra.mxu0 %v352
        %378 = vmatprep.subr.mxu0 0.0
        %379 = vmatpush1.msra.mxu0 %v353
        %380 = vmatprep.subr.mxu0 0.0
        %381 = vmatpush1.msra.mxu0 0.0
        %382 = vmatprep.subr.mxu0 0.0
        %383 = vmatpush1.msra.mxu0 0.0
        %384 = vmatprep.subr.mxu0 0.0
        %385 = vmatpush1.msra.mxu0 0.0
        %386 = vmatprep.subr.mxu0 0.0
        %387 = vmatpush1.msra.mxu0 0.0
        %388 = vmatprep.subr.mxu0 0.0
        %389 = vmatpush1.msra.mxu0 0.0
        %390 = vmatprep.subr.mxu0 0.0
        %391 = vmatpush1.msra.mxu0 0.0
        %392 = vmatprep.subr.mxu0 0.0
        %393 = vmatpush1.msra.mxu0 0.0
        %394 = vmatprep.subr.mxu0 0.0
        %395 = vmatpush1.msra.mxu0 0.0
        %396 = vmatprep.subr.mxu0 0.0
        %397 = vmatpush1.msra.mxu0 0.0
        %398 = vmatprep.subr.mxu0 0.0
        %399 = vmatpush1.msra.mxu0 0.0
        %400 = vmatprep.subr.mxu0 0.0
        %401 = vmatpush1.msra.mxu0 0.0
        %402 = vmatprep.subr.mxu0 0.0
        %403 = vmatpush1.msra.mxu0 0.0
        %404 = vmatprep.subr.mxu0 0.0
        %405 = vmatpush1.msra.mxu0 0.0
        %406 = vmatprep.subr.mxu0 0.0
        %407 = vmatpush1.msra.mxu0 0.0
        %408 = vmatprep.subr.mxu0 0.0
        %409 = vmatpush1.msra.mxu0 0.0
        %410 = vmatprep.subr.mxu0 0.0
        %411 = vmatpush1.msra.mxu0 0.0
        %412 = vmatprep.subr.mxu0 0.0
        %413 = vmatpush1.msra.mxu0 0.0
        %414 = vmatprep.subr.mxu0 0.0
        %415 = vmatpush1.msra.mxu0 0.0
        %416 = vmatprep.subr.mxu0 0.0
        %417 = vmatpush1.msra.mxu0 0.0
        %418 = vmatprep.subr.mxu0 0.0
        %419 = vmatpush1.msra.mxu0 0.0
        %420 = vmatprep.subr.mxu0 0.0
        %421 = vmatpush1.msra.mxu0 0.0
        %422 = vmatprep.subr.mxu0 0.0
        %423 = vmatpush1.msra.mxu0 0.0
        %424 = vmatprep.subr.mxu0 0.0
        %425 = vmatpush1.msra.mxu0 0.0
        %426 = vmatprep.subr.mxu0 0.0
        %427 = vmatpush1.msra.mxu0 0.0
        %428 = vmatprep.subr.mxu0 0.0
        %429 = vmatpush1.msra.mxu0 0.0
        %430 = vmatprep.subr.mxu0 0.0
        %431 = vmatpush1.msra.mxu0 0.0
        %432 = vmatprep.subr.mxu0 0.0
        %433 = vmatpush1.msra.mxu0 0.0
        %434 = vmatprep.subr.mxu0 0.0
        %435 = vmatpush1.msra.mxu0 0.0
        %436 = vmatprep.mubr.f32.mxu0 0.0
        %437 = vmatmul.mubr.f32.gmra.mrb[0].mxu0 %v361
        %v438 = vpop.f32.mrb[0].mxu0
        %v439 = vadd.f32 %v358, %v438
        %v440 = vpop.f32.mrb[0].mxu0
        %441 = vmatprep.mubr.f32.mxu0 0.0
        %442 = vmatmul.mubr.f32.gmra.mrb[0].mxu0 %v364
        %v443 = vpop.f32.mrb[0].mxu0
        %v444 = vadd.f32 %v358, %v443
        %v445 = vpop.f32.mrb[0].mxu0
        %446 = vmatprep.mubr.f32.mxu0 0.0
        %447 = vmatmul.mubr.f32.gmra.mrb[0].mxu0 %v367
        %v448 = vpop.f32.mrb[0].mxu0
        %v449 = vadd.f32 %v358, %v448
        %v450 = vpop.f32.mrb[0].mxu0
        %451 = vmatprep.mubr.f32.mxu0 0.0
        %452 = vmatmul.mubr.f32.gmra.mrb[0].mxu0 %v370
        %v453 = vpop.f32.mrb[0].mxu0
        %v454 = vadd.f32 %v358, %v453
        %v455 = vpop.f32.mrb[0].mxu0
        %456 = vdwg.mxu0
        %v457 = vld [vmem:[%s2] sm:$0xff]
        %v458 = vld [vmem:[%s2 + $0x8] sm:$0xff]
        %v459 = vld [vmem:[%s2 + $0x10] sm:$0xff]
        %v460 = vld [vmem:[%s2 + $0x18] sm:$0xff]
        %v461 = vld [vmem:[%s2 + $0x20] sm:$0xff]
        %v462 = vld [vmem:[%s2 + $0x28] sm:$0xff]
        %v463 = vld [vmem:[%s2 + $0x30] sm:$0xff]
        %v464 = vld [vmem:[%s2 + $0x38] sm:$0xff]
        %v465 = vld [vmem:[%s3] sm:$0xff]
        %v466 = vld [vmem:[%s3 + $0x8] sm:$0xff]
        %v467 = vld [vmem:[%s3 + $0x10] sm:$0xff]
        %v468 = vld [vmem:[%s3 + $0x18] sm:$0xff]
        %v469 = vld [vmem:[%s3 + $0x20] sm:$0xff]
        %v470 = vld [vmem:[%s3 + $0x28] sm:$0xff]
        %v471 = vld [vmem:[%s3 + $0x30] sm:$0xff]
        %v472 = vld [vmem:[%s3 + $0x38] sm:$0xff]
        %474 = vset.pattern.permute.xlu0 0
        %475 = vperm.xlu0 %474, %v465
        %v476 = vpop.permute.xlu0 %475
        %479 = vset.pattern.permute.xlu0 0
        %480 = vperm.xlu0 %479, %v466
        %v481 = vpop.permute.xlu0 %480
        %484 = vset.pattern.permute.xlu0 0
        %485 = vperm.xlu0 %484, %v467
        %v486 = vpop.permute.xlu0 %485
        %489 = vset.pattern.permute.xlu0 0
        %490 = vperm.xlu0 %489, %v468
        %v491 = vpop.permute.xlu0 %490
        %494 = vset.pattern.permute.xlu0 0
        %495 = vperm.xlu0 %494, %v469
        %v496 = vpop.permute.xlu0 %495
        %499 = vset.pattern.permute.xlu0 0
        %500 = vperm.xlu0 %499, %v470
        %v501 = vpop.permute.xlu0 %500
        %504 = vset.pattern.permute.xlu0 0
        %505 = vperm.xlu0 %504, %v471
        %v506 = vpop.permute.xlu0 %505
        %509 = vset.pattern.permute.xlu0 0
        %510 = vperm.xlu0 %509, %v472
        %v511 = vpop.permute.xlu0 %510
        %v514 = vsel %vm359, %v457, 0
        %v517 = vsel %vm359, %v458, 0
        %v520 = vsel %vm359, %v459, 0
        %v523 = vsel %vm359, %v460, 0
        %v526 = vsel %vm359, %v461, 0
        %v529 = vsel %vm359, %v462, 0
        %v532 = vsel %vm359, %v463, 0
        %v535 = vsel %vm359, %v464, 0
        %537 = vmatprep.subr.mxu0 0.0
        %538 = vmatpush1.msra.mxu0 %v439
        %539 = vmatprep.subr.mxu0 0.0
        %540 = vmatpush1.msra.mxu0 %v444
        %541 = vmatprep.subr.mxu0 0.0
        %542 = vmatpush1.msra.mxu0 %v449
        %543 = vmatprep.subr.mxu0 0.0
        %544 = vmatpush1.msra.mxu0 %v454
        %545 = vmatprep.subr.mxu0 0.0
        %546 = vmatpush1.msra.mxu0 0.0
        %547 = vmatprep.subr.mxu0 0.0
        %548 = vmatpush1.msra.mxu0 0.0
        %549 = vmatprep.subr.mxu0 0.0
        %550 = vmatpush1.msra.mxu0 0.0
        %551 = vmatprep.subr.mxu0 0.0
        %552 = vmatpush1.msra.mxu0 0.0
        %553 = vmatprep.subr.mxu0 0.0
        %554 = vmatpush1.msra.mxu0 0.0
        %555 = vmatprep.subr.mxu0 0.0
        %556 = vmatpush1.msra.mxu0 0.0
        %557 = vmatprep.subr.mxu0 0.0
        %558 = vmatpush1.msra.mxu0 0.0
        %559 = vmatprep.subr.mxu0 0.0
        %560 = vmatpush1.msra.mxu0 0.0
        %561 = vmatprep.subr.mxu0 0.0
        %562 = vmatpush1.msra.mxu0 0.0
        %563 = vmatprep.subr.mxu0 0.0
        %564 = vmatpush1.msra.mxu0 0.0
        %565 = vmatprep.subr.mxu0 0.0
        %566 = vmatpush1.msra.mxu0 0.0
        %567 = vmatprep.subr.mxu0 0.0
        %568 = vmatpush1.msra.mxu0 0.0
        %569 = vmatprep.subr.mxu0 0.0
        %570 = vmatpush1.msra.mxu0 0.0
        %571 = vmatprep.subr.mxu0 0.0
        %572 = vmatpush1.msra.mxu0 0.0
        %573 = vmatprep.subr.mxu0 0.0
        %574 = vmatpush1.msra.mxu0 0.0
        %575 = vmatprep.subr.mxu0 0.0
        %576 = vmatpush1.msra.mxu0 0.0
        %577 = vmatprep.subr.mxu0 0.0
        %578 = vmatpush1.msra.mxu0 0.0
        %579 = vmatprep.subr.mxu0 0.0
        %580 = vmatpush1.msra.mxu0 0.0
        %581 = vmatprep.subr.mxu0 0.0
        %582 = vmatpush1.msra.mxu0 0.0
        %583 = vmatprep.subr.mxu0 0.0
        %584 = vmatpush1.msra.mxu0 0.0
        %585 = vmatprep.subr.mxu0 0.0
        %586 = vmatpush1.msra.mxu0 0.0
        %587 = vmatprep.subr.mxu0 0.0
        %588 = vmatpush1.msra.mxu0 0.0
        %589 = vmatprep.subr.mxu0 0.0
        %590 = vmatpush1.msra.mxu0 0.0
        %591 = vmatprep.subr.mxu0 0.0
        %592 = vmatpush1.msra.mxu0 0.0
        %593 = vmatprep.subr.mxu0 0.0
        %594 = vmatpush1.msra.mxu0 0.0
        %595 = vmatprep.subr.mxu0 0.0
        %596 = vmatpush1.msra.mxu0 0.0
        %597 = vmatprep.subr.mxu0 0.0
        %598 = vmatpush1.msra.mxu0 0.0
        %599 = vmatprep.subr.mxu0 0.0
        %600 = vmatpush1.msra.mxu0 0.0
        %601 = vmatprep.mubr.f32.mxu0 0.0
        %602 = vmatmul.mubr.f32.gmra.mrb[0].mxu0 %v514
        %v603 = vpop.f32.mrb[0].mxu0
        %v604 = vadd.f32 %v476, %v603
        %v605 = vpop.f32.mrb[0].mxu0
        %606 = vmatprep.mubr.f32.mxu0 0.0
        %607 = vmatmul.mubr.f32.gmra.mrb[0].mxu0 %v517
        %v608 = vpop.f32.mrb[0].mxu0
        %v609 = vadd.f32 %v481, %v608
        %v610 = vpop.f32.mrb[0].mxu0
        %611 = vmatprep.mubr.f32.mxu0 0.0
        %612 = vmatmul.mubr.f32.gmra.mrb[0].mxu0 %v520
        %v613 = vpop.f32.mrb[0].mxu0
        %v614 = vadd.f32 %v486, %v613
        %v615 = vpop.f32.mrb[0].mxu0
        %616 = vmatprep.mubr.f32.mxu0 0.0
        %617 = vmatmul.mubr.f32.gmra.mrb[0].mxu0 %v523
        %v618 = vpop.f32.mrb[0].mxu0
        %v619 = vadd.f32 %v491, %v618
        %v620 = vpop.f32.mrb[0].mxu0
        %621 = vmatprep.mubr.f32.mxu0 0.0
        %622 = vmatmul.mubr.f32.gmra.mrb[0].mxu0 %v526
        %v623 = vpop.f32.mrb[0].mxu0
        %v624 = vadd.f32 %v496, %v623
        %v625 = vpop.f32.mrb[0].mxu0
        %626 = vmatprep.mubr.f32.mxu0 0.0
        %627 = vmatmul.mubr.f32.gmra.mrb[0].mxu0 %v529
        %v628 = vpop.f32.mrb[0].mxu0
        %v629 = vadd.f32 %v501, %v628
        %v630 = vpop.f32.mrb[0].mxu0
        %631 = vmatprep.mubr.f32.mxu0 0.0
        %632 = vmatmul.mubr.f32.gmra.mrb[0].mxu0 %v532
        %v633 = vpop.f32.mrb[0].mxu0
        %v634 = vadd.f32 %v506, %v633
        %v635 = vpop.f32.mrb[0].mxu0
        %636 = vmatprep.mubr.f32.mxu0 0.0
        %637 = vmatmul.mubr.f32.gmra.mrb[0].mxu0 %v535
        %v638 = vpop.f32.mrb[0].mxu0
        %v639 = vadd.f32 %v511, %v638
        %v640 = vpop.f32.mrb[0].mxu0
        %641 = vdwg.mxu0
        %v642 = vmax.f32 %v604, 0.0
        %v643 = vmax.f32 %v609, 0.0
        %v644 = vmax.f32 %v614, 0.0
        %v645 = vmax.f32 %v619, 0.0
        %v646 = vmax.f32 %v624, 0.0
        %v647 = vmax.f32 %v629, 0.0
        %v648 = vmax.f32 %v634, 0.0
        %v649 = vmax.f32 %v639, 0.0
        %v650 = vld [vmem:[%s4] sm:$0xff]
        %v651 = vld [vmem:[%s4 + $0x8] sm:$0xff]
        %v652 = vld [vmem:[%s4 + $0x10] sm:$0xff]
        %v653 = vld [vmem:[%s4 + $0x18] sm:$0xff]
        %v654 = vld [vmem:[%s5] sm:$0xff]
        %v655 = vld [vmem:[%s5 + $0x8] sm:$0xff]
        %v656 = vld [vmem:[%s5 + $0x10] sm:$0xff]
        %v657 = vld [vmem:[%s5 + $0x18] sm:$0xff]
        %659 = vset.pattern.permute.xlu0 0
        %660 = vperm.xlu0 %659, %v654
        %v661 = vpop.permute.xlu0 %660
        %664 = vset.pattern.permute.xlu0 0
        %665 = vperm.xlu0 %664, %v655
        %v666 = vpop.permute.xlu0 %665
        %669 = vset.pattern.permute.xlu0 0
        %670 = vperm.xlu0 %669, %v656
        %v671 = vpop.permute.xlu0 %670
        %674 = vset.pattern.permute.xlu0 0
        %675 = vperm.xlu0 %674, %v657
        %v676 = vpop.permute.xlu0 %675
        %vm678 = vcmask 523264
        %v680 = vsel %vm678, %v650, 0
        %v683 = vsel %vm678, %v651, 0
        %v686 = vsel %vm678, %v652, 0
        %v689 = vsel %vm678, %v653, 0
        %691 = vmatprep.subr.mxu0 0.0
        %692 = vmatpush1.msra.mxu0 %v642
        %693 = vmatprep.subr.mxu0 0.0
        %694 = vmatpush1.msra.mxu0 %v643
        %695 = vmatprep.subr.mxu0 0.0
        %696 = vmatpush1.msra.mxu0 %v644
        %697 = vmatprep.subr.mxu0 0.0
        %698 = vmatpush1.msra.mxu0 %v645
        %699 = vmatprep.subr.mxu0 0.0
        %700 = vmatpush1.msra.mxu0 %v646
        %701 = vmatprep.subr.mxu0 0.0
        %702 = vmatpush1.msra.mxu0 %v647
        %703 = vmatprep.subr.mxu0 0.0
        %704 = vmatpush1.msra.mxu0 %v648
        %705 = vmatprep.subr.mxu0 0.0
        %706 = vmatpush1.msra.mxu0 %v649
        %707 = vmatprep.subr.mxu0 0.0
        %708 = vmatpush1.msra.mxu0 0.0
        %709 = vmatprep.subr.mxu0 0.0
        %710 = vmatpush1.msra.mxu0 0.0
        %711 = vmatprep.subr.mxu0 0.0
        %712 = vmatpush1.msra.mxu0 0.0
        %713 = vmatprep.subr.mxu0 0.0
        %714 = vmatpush1.msra.mxu0 0.0
        %715 = vmatprep.subr.mxu0 0.0
        %716 = vmatpush1.msra.mxu0 0.0
        %717 = vmatprep.subr.mxu0 0.0
        %718 = vmatpush1.msra.mxu0 0.0
        %719 = vmatprep.subr.mxu0 0.0
        %720 = vmatpush1.msra.mxu0 0.0
        %721 = vmatprep.subr.mxu0 0.0
        %722 = vmatpush1.msra.mxu0 0.0
        %723 = vmatprep.subr.mxu0 0.0
        %724 = vmatpush1.msra.mxu0 0.0
        %725 = vmatprep.subr.mxu0 0.0
        %726 = vmatpush1.msra.mxu0 0.0
        %727 = vmatprep.subr.mxu0 0.0
        %728 = vmatpush1.msra.mxu0 0.0
        %729 = vmatprep.subr.mxu0 0.0
        %730 = vmatpush1.msra.mxu0 0.0
        %731 = vmatprep.subr.mxu0 0.0
        %732 = vmatpush1.msra.mxu0 0.0
        %733 = vmatprep.subr.mxu0 0.0
        %734 = vmatpush1.msra.mxu0 0.0
        %735 = vmatprep.subr.mxu0 0.0
        %736 = vmatpush1.msra.mxu0 0.0
        %737 = vmatprep.subr.mxu0 0.0
        %738 = vmatpush1.msra.mxu0 0.0
        %739 = vmatprep.subr.mxu0 0.0
        %740 = vmatpush1.msra.mxu0 0.0
        %741 = vmatprep.subr.mxu0 0.0
        %742 = vmatpush1.msra.mxu0 0.0
        %743 = vmatprep.subr.mxu0 0.0
        %744 = vmatpush1.msra.mxu0 0.0
        %745 = vmatprep.subr.mxu0 0.0
        %746 = vmatpush1.msra.mxu0 0.0
        %747 = vmatprep.subr.mxu0 0.0
        %748 = vmatpush1.msra.mxu0 0.0
        %749 = vmatprep.subr.mxu0 0.0
        %750 = vmatpush1.msra.mxu0 0.0
        %751 = vmatprep.subr.mxu0 0.0
        %752 = vmatpush1.msra.mxu0 0.0
        %753 = vmatprep.subr.mxu0 0.0
        %754 = vmatpush1.msra.mxu0 0.0
        %755 = vmatprep.mubr.f32.mxu0 0.0
        %756 = vmatmul.mubr.f32.gmra.mrb[0].mxu0 %v680
        %v757 = vpop.f32.mrb[0].mxu0
        %v758 = vadd.f32 %v661, %v757
        %v759 = vpop.f32.mrb[0].mxu0
        %760 = vmatprep.mubr.f32.mxu0 0.0
        %761 = vmatmul.mubr.f32.gmra.mrb[0].mxu0 %v683
        %v762 = vpop.f32.mrb[0].mxu0
        %v763 = vadd.f32 %v666, %v762
        %v764 = vpop.f32.mrb[0].mxu0
        %765 = vmatprep.mubr.f32.mxu0 0.0
        %766 = vmatmul.mubr.f32.gmra.mrb[0].mxu0 %v686
        %v767 = vpop.f32.mrb[0].mxu0
        %v768 = vadd.f32 %v671, %v767
        %v769 = vpop.f32.mrb[0].mxu0
        %770 = vmatprep.mubr.f32.mxu0 0.0
        %771 = vmatmul.mubr.f32.gmra.mrb[0].mxu0 %v689
        %v772 = vpop.f32.mrb[0].mxu0
        %v773 = vadd.f32 %v676, %v772
        %v774 = vpop.f32.mrb[0].mxu0
        %775 = vdwg.mxu0
        %v776 = vadd.f32 %v758, %v439
        %v777 = vadd.f32 %v763, %v444
        %v778 = vadd.f32 %v768, %v449
        %v779 = vadd.f32 %v773, %v454
        %v780 = vld [vmem:[%s6] sm:$0xff]
        %v781 = vld [vmem:[%s6 + $0x8] sm:$0xff]
        %v782 = vld [vmem:[%s6 + $0x10] sm:$0xff]
        %v783 = vld [vmem:[%s6 + $0x18] sm:$0xff]
        %v785 = vsel %vm359, %v780, 0
        %v788 = vsel %vm359, %v781, 0
        %v791 = vsel %vm359, %v782, 0
        %v794 = vsel %vm359, %v783, 0
        %796 = vmatprep.subr.mxu0 0.0
        %797 = vmatpush1.msra.mxu0 %v776
        %798 = vmatprep.subr.mxu0 0.0
        %799 = vmatpush1.msra.mxu0 %v777
        %800 = vmatprep.subr.mxu0 0.0
        %801 = vmatpush1.msra.mxu0 %v778
        %802 = vmatprep.subr.mxu0 0.0
        %803 = vmatpush1.msra.mxu0 %v779
        %804 = vmatprep.subr.mxu0 0.0
        %805 = vmatpush1.msra.mxu0 0.0
        %806 = vmatprep.subr.mxu0 0.0
        %807 = vmatpush1.msra.mxu0 0.0
        %808 = vmatprep.subr.mxu0 0.0
        %809 = vmatpush1.msra.mxu0 0.0
        %810 = vmatprep.subr.mxu0 0.0
        %811 = vmatpush1.msra.mxu0 0.0
        %812 = vmatprep.subr.mxu0 0.0
        %813 = vmatpush1.msra.mxu0 0.0
        %814 = vmatprep.subr.mxu0 0.0
        %815 = vmatpush1.msra.mxu0 0.0
        %816 = vmatprep.subr.mxu0 0.0
        %817 = vmatpush1.msra.mxu0 0.0
        %818 = vmatprep.subr.mxu0 0.0
        %819 = vmatpush1.msra.mxu0 0.0
        %820 = vmatprep.subr.mxu0 0.0
        %821 = vmatpush1.msra.mxu0 0.0
        %822 = vmatprep.subr.mxu0 0.0
        %823 = vmatpush1.msra.mxu0 0.0
        %824 = vmatprep.subr.mxu0 0.0
        %825 = vmatpush1.msra.mxu0 0.0
        %826 = vmatprep.subr.mxu0 0.0
        %827 = vmatpush1.msra.mxu0 0.0
        %828 = vmatprep.subr.mxu0 0.0
        %829 = vmatpush1.msra.mxu0 0.0
        %830 = vmatprep.subr.mxu0 0.0
        %831 = vmatpush1.msra.mxu0 0.0
        %832 = vmatprep.subr.mxu0 0.0
        %833 = vmatpush1.msra.mxu0 0.0
        %834 = vmatprep.subr.mxu0 0.0
        %835 = vmatpush1.msra.mxu0 0.0
        %836 = vmatprep.subr.mxu0 0.0
        %837 = vmatpush1.msra.mxu0 0.0
        %838 = vmatprep.subr.mxu0 0.0
        %839 = vmatpush1.msra.mxu0 0.0
        %840 = vmatprep.subr.mxu0 0.0
        %841 = vmatpush1.msra.mxu0 0.0
        %842 = vmatprep.subr.mxu0 0.0
        %843 = vmatpush1.msra.mxu0 0.0
        %844 = vmatprep.subr.mxu0 0.0
        %845 = vmatpush1.msra.mxu0 0.0
        %846 = vmatprep.subr.mxu0 0.0
        %847 = vmatpush1.msra.mxu0 0.0
        %848 = vmatprep.subr.mxu0 0.0
        %849 = vmatpush1.msra.mxu0 0.0
        %850 = vmatprep.subr.mxu0 0.0
        %851 = vmatpush1.msra.mxu0 0.0
        %852 = vmatprep.subr.mxu0 0.0
        %853 = vmatpush1.msra.mxu0 0.0
        %854 = vmatprep.subr.mxu0 0.0
        %855 = vmatpush1.msra.mxu0 0.0
        %856 = vmatprep.subr.mxu0 0.0
        %857 = vmatpush1.msra.mxu0 0.0
        %858 = vmatprep.subr.mxu0 0.0
        %859 = vmatpush1.msra.mxu0 0.0
        %860 = vmatprep.mubr.f32.mxu0 0.0
        %861 = vmatmul.mubr.f32.gmra.mrb[0].mxu0 %v785
        %v862 = vpop.f32.mrb[0].mxu0
        %v863 = vadd.f32 0.0, %v862
        %v864 = vpop.f32.mrb[0].mxu0
        %865 = vmatprep.mubr.f32.mxu0 0.0
        %866 = vmatmul.mubr.f32.gmra.mrb[0].mxu0 %v788
        %v867 = vpop.f32.mrb[0].mxu0
        %v868 = vadd.f32 0.0, %v867
        %v869 = vpop.f32.mrb[0].mxu0
        %870 = vmatprep.mubr.f32.mxu0 0.0
        %871 = vmatmul.mubr.f32.gmra.mrb[0].mxu0 %v791
        %v872 = vpop.f32.mrb[0].mxu0
        %v873 = vadd.f32 0.0, %v872
        %v874 = vpop.f32.mrb[0].mxu0
        %875 = vmatprep.mubr.f32.mxu0 0.0
        %876 = vmatmul.mubr.f32.gmra.mrb[0].mxu0 %v794
        %v877 = vpop.f32.mrb[0].mxu0
        %v878 = vadd.f32 0.0, %v877
        %v879 = vpop.f32.mrb[0].mxu0
        %880 = vdwg.mxu0
        %v881 = vld [vmem:[#allocation2] sm:$0xff]
        %v882 = vld [vmem:[#allocation2 + $0x8] sm:$0xff]
        %v883 = vld [vmem:[#allocation2 + $0x10] sm:$0xff]
        %v884 = vld [vmem:[#allocation2 + $0x18] sm:$0xff]
        %v885 = vld [vmem:[%s8 + $0x1] sm:$0x1]
        %v886 = vlaneseq
        %v887 = vshrl.u32 %v886, 7
        %v888 = vsub.s32 0, %v887
        %v889 = vrot.slane %v885, %v888
        %v891 = vsel %vm359, %v863, 0
        %v894 = vsel %vm359, %v868, 0
        %v897 = vsel %vm359, %v873, 0
        %v900 = vsel %vm359, %v878, 0
        %902 = vmatprep.subr.mxu0 0.0
        %903 = vmatpush1.msra.mxu0 %v881
        %904 = vmatprep.subr.mxu0 0.0
        %905 = vmatpush1.msra.mxu0 %v882
        %906 = vmatprep.subr.mxu0 0.0
        %907 = vmatpush1.msra.mxu0 %v883
        %908 = vmatprep.subr.mxu0 0.0
        %909 = vmatpush1.msra.mxu0 %v884
        %910 = vmatprep.subr.mxu0 0.0
        %911 = vmatpush1.msra.mxu0 0.0
        %912 = vmatprep.subr.mxu0 0.0
        %913 = vmatpush1.msra.mxu0 0.0
        %914 = vmatprep.subr.mxu0 0.0
        %915 = vmatpush1.msra.mxu0 0.0
        %916 = vmatprep.subr.mxu0 0.0
        %917 = vmatpush1.msra.mxu0 0.0
        %918 = vmatprep.subr.mxu0 0.0
        %919 = vmatpush1.msra.mxu0 0.0
        %920 = vmatprep.subr.mxu0 0.0
        %921 = vmatpush1.msra.mxu0 0.0
        %922 = vmatprep.subr.mxu0 0.0
        %923 = vmatpush1.msra.mxu0 0.0
        %924 = vmatprep.subr.mxu0 0.0
        %925 = vmatpush1.msra.mxu0 0.0
        %926 = vmatprep.subr.mxu0 0.0
        %927 = vmatpush1.msra.mxu0 0.0
        %928 = vmatprep.subr.mxu0 0.0
        %929 = vmatpush1.msra.mxu0 0.0
        %930 = vmatprep.subr.mxu0 0.0
        %931 = vmatpush1.msra.mxu0 0.0
        %932 = vmatprep.subr.mxu0 0.0
        %933 = vmatpush1.msra.mxu0 0.0
        %934 = vmatprep.subr.mxu0 0.0
        %935 = vmatpush1.msra.mxu0 0.0
        %936 = vmatprep.subr.mxu0 0.0
        %937 = vmatpush1.msra.mxu0 0.0
        %938 = vmatprep.subr.mxu0 0.0
        %939 = vmatpush1.msra.mxu0 0.0
        %940 = vmatprep.subr.mxu0 0.0
        %941 = vmatpush1.msra.mxu0 0.0
        %942 = vmatprep.subr.mxu0 0.0
        %943 = vmatpush1.msra.mxu0 0.0
        %944 = vmatprep.subr.mxu0 0.0
        %945 = vmatpush1.msra.mxu0 0.0
        %946 = vmatprep.subr.mxu0 0.0
        %947 = vmatpush1.msra.mxu0 0.0
        %948 = vmatprep.subr.mxu0 0.0
        %949 = vmatpush1.msra.mxu0 0.0
        %950 = vmatprep.subr.mxu0 0.0
        %951 = vmatpush1.msra.mxu0 0.0
        %952 = vmatprep.subr.mxu0 0.0
        %953 = vmatpush1.msra.mxu0 0.0
        %954 = vmatprep.subr.mxu0 0.0
        %955 = vmatpush1.msra.mxu0 0.0
        %956 = vmatprep.subr.mxu0 0.0
        %957 = vmatpush1.msra.mxu0 0.0
        %958 = vmatprep.subr.mxu0 0.0
        %959 = vmatpush1.msra.mxu0 0.0
        %960 = vmatprep.subr.mxu0 0.0
        %961 = vmatpush1.msra.mxu0 0.0
        %962 = vmatprep.subr.mxu0 0.0
        %963 = vmatpush1.msra.mxu0 0.0
        %964 = vmatprep.subr.mxu0 0.0
        %965 = vmatpush1.msra.mxu0 0.0
        %966 = vmatprep.mubr.f32.mxu0 0.0
        %967 = vmatmul.mubr.f32.gmra.mrb[0].mxu0 %v891
        %v968 = vpop.f32.mrb[0].mxu0
        %v969 = vadd.f32 %v889, %v968
        %v970 = vpop.f32.mrb[0].mxu0
        %971 = vmatprep.mubr.f32.mxu0 0.0
        %972 = vmatmul.mubr.f32.gmra.mrb[0].mxu0 %v894
        %v973 = vpop.f32.mrb[0].mxu0
        %v974 = vadd.f32 %v889, %v973
        %v975 = vpop.f32.mrb[0].mxu0
        %976 = vmatprep.mubr.f32.mxu0 0.0
        %977 = vmatmul.mubr.f32.gmra.mrb[0].mxu0 %v897
        %v978 = vpop.f32.mrb[0].mxu0
        %v979 = vadd.f32 %v889, %v978
        %v980 = vpop.f32.mrb[0].mxu0
        %981 = vmatprep.mubr.f32.mxu0 0.0
        %982 = vmatmul.mubr.f32.gmra.mrb[0].mxu0 %v900
        %v983 = vpop.f32.mrb[0].mxu0
        %v984 = vadd.f32 %v889, %v983
        %v985 = vpop.f32.mrb[0].mxu0
        %986 = vdwg.mxu0
        %987 = vst.msk [vmem:[%s340] sm:$0xff] %vm359, %v969
        %988 = vst.msk [vmem:[%s340 + $0x8] sm:$0xff] %vm359, %v974
        %989 = vst.msk [vmem:[%s340 + $0x10] sm:$0xff] %vm359, %v979
        %990 = vst.msk [vmem:[%s340 + $0x18] sm:$0xff] %vm359, %v984
        %s991 = sand.u32 %s226, 1
        %s992 = scalar_lea.sflag [#allocation4], %s991
        %s993 = sand.u32 %s226, 1
        %s994 = smul.addr %s993, 32
        %s995 = scalar_lea.vmem [#allocation5], %s994
        // Predicated region
        $region61: #{tpu_custom_call.1} parent=55 // pred_check
          %p996 = pneg %p236
        $region62: #{tpu_custom_call.1} parent=55 // pred_check_branch
          %998 = sbr.rel (%p996) target = $region64
        $region63: #{tpu_custom_call.1} parent=55 // pred_region
          %s1000 = ssub.s32 512, 512
          %1001 = vsyncadd %s992, %s1000
          %s1002 = smul.addr %s24, 4
          %s1003 = smul.addr %s1002, 128
          %s1004 = scalar_lea.hbm %s9, %s1003
          %s1005 = sshll.u32 %s995, 4
          %s1006 = int_to_ptr.vmem [resolvable:$true] %s1005
          %1011 = dma.vmem_to_hbm [thread:$0]  %s1006, 512, %s1004, %s992, 128, 128, 8
        $region64: #{tpu_custom_call.1} parent=55 // pred_fallthru
          _
      $region56: #{tpu_custom_call.1} parent=5 // pred_fallthru
        _
      %p1012 = scmp.le.s32.totalorder 2, %s19
      // Predicated region
      $region65: #{tpu_custom_call.1} parent=5 // pred_check
        %p1013 = pneg %p1012
      $region66: #{tpu_custom_call.1} parent=5 // pred_check_branch
        %1015 = sbr.rel (%p1013) target = $region68
      $region67: #{tpu_custom_call.1} parent=5 // pred_region
        %s1016 = ssub.s32 %s19, 2
        // Predicated region
        $region69: #{tpu_custom_call.1} parent=67 // pred_check
          %p1017 = pneg %p242
        $region70: #{tpu_custom_call.1} parent=67 // pred_check_branch
          %1019 = sbr.rel (%p1017) target = $region72
        $region71: #{tpu_custom_call.1} parent=67 // pred_region
          %s1020 = sand.u32 %s227, 1
          %s1021 = scalar_lea.sflag [#allocation4], %s1020
          %s1022 = sand.u32 %s227, 1
          %s1023 = smul.addr %s1022, 32
          %s1024 = scalar_lea.vmem [#allocation5], %s1023
          %1025 = dma.done %s1021, 512
        $region72: #{tpu_custom_call.1} parent=67 // pred_fallthru
          _
      $region68: #{tpu_custom_call.1} parent=5 // pred_fallthru
        _
    $region6: #{tpu_custom_call.1} parent=1 // loop_footer
      %s23 = sadd.s32 1, %s19
    $region7: #{tpu_custom_call.1} parent=1 // loop_footer_branch
      %18 = sbr.rel target = $region3
    $region8: #{tpu_custom_call.1} parent=1 // loop_exit
      _
    %1026 = vsyncpa [#allocation3], 1
    %s1027 = scalar_lea.sflag [#allocation3], 1
    %1028 = vsyncpa %s1027, 1
    %1029 = vsyncpa [#allocation4], 1
    %s1030 = scalar_lea.sflag [#allocation4], 1
    %1031 = vsyncpa %s1030, 1

</llo_original>
